<compile_context>
chip_gen: v5e
topology: v5e:2x2
jax: 0.10.0
libtpu: 0.0.40
codegen_flags: <defaults>
</compile_context>

<pallas_src>
import functools
import math

import jax
import jax.numpy as jnp
from jax import lax
from jax.experimental import pallas as pl
from jax.experimental.pallas import tpu as pltpu


def _round_up(v, m):
    return ((v + m - 1) // m) * m


def _sublane(dtype):
    itemsize = jnp.dtype(dtype).itemsize
    if itemsize >= 4:
        return 8
    if itemsize == 2:
        return 16
    return 32


def _vmem_capacity_bytes():
    try:
        return int(pltpu.get_tpu_info().vmem_capacity_bytes)
    except Exception:
        return 64 << 20          # conservative (v7x per-TensorCore VMEM)


# --------------------------------------------------------------------------- #
# Kernels
# --------------------------------------------------------------------------- #
def _mhl_kernel_acc(x_ref, w_ref, b_ref, o_ref, acc_ref, *, precision):
    """Tiled matmul with K as the innermost grid axis (f32 accumulator)."""
    k = pl.program_id(2)

    @pl.when(k == 0)
    def _():
        acc_ref[...] = jnp.zeros_like(acc_ref)

    acc_ref[...] += lax.dot_general(
        x_ref[...], w_ref[...],
        dimension_numbers=(((1,), (0,)), ((), ())),
        preferred_element_type=jnp.float32,
        precision=precision)

    @pl.when(k == pl.num_programs(2) - 1)
    def _():
        # Bias add + cast only once per output tile (not per K step).
        o_ref[...] = (acc_ref[...]
                      + b_ref[...].astype(jnp.float32)).astype(o_ref.dtype)


def _mhl_kernel_single_k(x_ref, w_ref, b_ref, o_ref, *, precision):
    """Full-K matmul: no K grid axis, no accumulator scratch RMW."""
    acc = lax.dot_general(
        x_ref[...], w_ref[...],
        dimension_numbers=(((1,), (0,)), ((), ())),
        preferred_element_type=jnp.float32,
        precision=precision)
    o_ref[...] = (acc + b_ref[...].astype(jnp.float32)).astype(o_ref.dtype)


# --------------------------------------------------------------------------- #
# Wrapper
# --------------------------------------------------------------------------- #
def pack_multihead_weight(weight, compute_dtype=None):
    """Repack (H, out_f, in_f) -> fused (in_f, H*out_f) once (for static weights).

    Cast happens BEFORE the transpose so the repack HBM pass runs at the
    (possibly narrower) compute width.
    """
    if compute_dtype is not None:
        weight = weight.astype(compute_dtype)
    h, o, i = weight.shape
    return jnp.transpose(weight, (2, 0, 1)).reshape(i, h * o)


def multihead_linear(x, weight, bias=None, *, n_heads=None, out_features=None,
                     tm=None, tn=None, tk=None, compute_dtype=None,
                     precision=None):
    """y[h] = x @ W[h]^T + b[h].

    x:      (..., in_f)
    weight: (H, out_f, in_f)   or pre-fused (in_f, H*out_f) from
            pack_multihead_weight (then n_heads/out_features are required).
    bias:   (H, out_f) or fused (H*out_f,) or None.
    Returns (H, ..., out_f).
    """
    out_dtype = x.dtype
    in_dtype = jnp.dtype(compute_dtype if compute_dtype is not None else x.dtype)
    in_bytes = in_dtype.itemsize
    out_bytes = jnp.dtype(out_dtype).itemsize

    # f32 inputs: keep bit-level accuracy on the MXU (multi-pass) by default.
    if precision is None and in_dtype == jnp.dtype(jnp.float32):
        precision = lax.Precision.HIGHEST

    # ---- weight / bias fusion (one-time layout change; cast before repack) ---
    if weight.ndim == 3:
        n_heads, out_f, in_f = weight.shape
        w_fused = pack_multihead_weight(weight, in_dtype)
    else:
        assert n_heads is not None and out_features is not None, \
            "pre-fused weight needs n_heads/out_features"
        in_f, nfw = weight.shape
        out_f = out_features
        assert nfw == n_heads * out_f
        w_fused = weight.astype(in_dtype)
    nf = n_heads * out_f

    if bias is None:
        b_fused = jnp.zeros((1, nf), dtype=jnp.float32)
    else:
        b_fused = bias.reshape(1, nf)
    bias_bytes = jnp.dtype(b_fused.dtype).itemsize

    # ---- flatten leading dims of x -------------------------------------------
    lead_shape = x.shape[:-1]
    n = int(math.prod(lead_shape)) if lead_shape else 1
    x2 = x.reshape(n, in_f)

    # ---- generation-aware VMEM budget ----------------------------------------
    capacity = _vmem_capacity_bytes()
    big_vmem = capacity >= (96 << 20)            # v5e / v6e (128 MiB)
    vmem_cap = (100 << 20) if big_vmem else max(capacity - (16 << 20), 32 << 20)
    headroom = 2 << 20

    def needed(tm_, tn_, tk_):
        return (2 * tm_ * tk_ * in_bytes         # x tile (double-buffered)
                + 2 * tk_ * tn_ * in_bytes       # W tile
                + 2 * tn_ * bias_bytes           # bias tile
                + 2 * tm_ * tn_ * out_bytes      # out tile
                + tm_ * tn_ * 4)                 # f32 accumulator

    def fits(tm_, tn_, tk_):
        return needed(tm_, tn_, tk_) + headroom <= vmem_cap

    # ---- tile selection -------------------------------------------------------
    sublane = _sublane(in_dtype)
    m_min = _round_up(max(n, 1), sublane)
    k_min = _round_up(in_f, 128)
    nf_min = _round_up(nf, 128)

    if tm is None:
        tm = 512
    tm = _round_up(min(tm, m_min), sublane)

    if tn is None:
        tn = 1024 if (big_vmem and in_bytes <= 2) else 512
    tn = _round_up(min(tn, nf_min), 128)

    if tk is None:
        tk = min(1024 if in_bytes <= 2 else 512, k_min)
        tk = _round_up(tk, 128)
        if fits(tm, tn, k_min):
            tk = k_min                            # full K: drop the K grid axis
        else:
            while tk * 2 <= k_min and fits(tm, tn, tk * 2):
                tk *= 2
    else:
        tk = _round_up(min(tk, k_min), 128)

    # Shrink (guards oversized user tiles / small-VMEM generations).
    while not fits(tm, tn, tk):
        if tk > 512:
            tk = _round_up(pl.cdiv(tk, 2), 128)
        elif tn > 256:
            tn = _round_up(pl.cdiv(tn, 2), 128)
        elif tm > sublane:
            tm = max(sublane, _round_up(pl.cdiv(tm, 2), sublane))
        elif tk > 128:
            tk = _round_up(pl.cdiv(tk, 2), 128)
        else:
            break

    m_pad = _round_up(m_min, tm)
    k_pad = _round_up(k_min, tk)
    nf_pad = _round_up(nf_min, tn)

    # Guarantee >=2 blocks across the parallel axes (keeps both v7x TCs busy).
    if (m_pad // tm) * (nf_pad // tn) < 2:
        if nf_pad > 128:
            tn = _round_up(pl.cdiv(nf_pad, 2), 128)
            nf_pad = 2 * tn
        elif m_pad > sublane:
            tm = _round_up(pl.cdiv(m_pad, 2), sublane)
            m_pad = 2 * tm

    # ---- pad operands (cast first so padding runs at the narrow width) -------
    x_p = jnp.pad(x2.astype(in_dtype), ((0, m_pad - n), (0, k_pad - in_f)))
    w_p = jnp.pad(w_fused, ((0, k_pad - in_f), (0, nf_pad - nf)))
    b_p = jnp.pad(b_fused, ((0, 0), (0, nf_pad - nf)))

    vmem_limit = int(min(vmem_cap, max(needed(tm, tn, tk) + headroom, 8 << 20)))
    cost = pl.CostEstimate(
        flops=2 * m_pad * k_pad * nf_pad,
        transcendentals=0,
        bytes_accessed=(m_pad * k_pad * in_bytes + k_pad * nf_pad * in_bytes
                        + nf_pad * bias_bytes + m_pad * nf_pad * out_bytes))

    nk = k_pad // tk
    if nk == 1:
        # Full-K in one tile: scratch-free kernel, 2-D parallel grid.
        grid_spec = pltpu.PrefetchScalarGridSpec(
            num_scalar_prefetch=0,
            grid=(m_pad // tm, nf_pad // tn),
            in_specs=[
                pl.BlockSpec((tm, tk), lambda i, j: (i, 0)),   # x tile
                pl.BlockSpec((tk, tn), lambda i, j: (0, j)),   # fused weight tile
                pl.BlockSpec((1, tn), lambda i, j: (0, j)),    # fused bias tile
            ],
            out_specs=pl.BlockSpec((tm, tn), lambda i, j: (i, j)),
        )
        kernel = functools.partial(_mhl_kernel_single_k, precision=precision)
        dim_sem = ("parallel", "parallel")
    else:
        grid_spec = pltpu.PrefetchScalarGridSpec(
            num_scalar_prefetch=0,
            grid=(m_pad // tm, nf_pad // tn, nk),
            in_specs=[
                pl.BlockSpec((tm, tk), lambda i, j, k: (i, k)),
                pl.BlockSpec((tk, tn), lambda i, j, k: (k, j)),
                pl.BlockSpec((1, tn), lambda i, j, k: (0, j)),
            ],
            out_specs=pl.BlockSpec((tm, tn), lambda i, j, k: (i, j)),
            scratch_shapes=[pltpu.VMEM((tm, tn), jnp.float32)],
        )
        kernel = functools.partial(_mhl_kernel_acc, precision=precision)
        dim_sem = ("parallel", "parallel", "arbitrary")

    y_pad = pl.pallas_call(
        kernel,
        out_shape=jax.ShapeDtypeStruct((m_pad, nf_pad), out_dtype),
        grid_spec=grid_spec,
        compiler_params=pltpu.CompilerParams(
            dimension_semantics=dim_sem,
            vmem_limit_bytes=vmem_limit),
        cost_estimate=cost,
    )(x_p, w_p, b_p)

    # Un-fuse heads outside the kernel (cheap layout ops on the final result).
    y = y_pad[:n, :nf].reshape(n, n_heads, out_f)
    y = jnp.transpose(y, (1, 0, 2))
    return y.reshape((n_heads,) + lead_shape + (out_f,))


# --------------------------------------------------------------------------- #
# Demo / self-test
# --------------------------------------------------------------------------- #
if __name__ == "__main__":
    # Small shapes consistent with the module's forward; deliberately NOT
    # tile-aligned so padding / slicing / grid-splitting paths are exercised.
    N = 12          # batch rows
    IN_F = 200      # in_features
    OUT_F = 48      # out_features
    H = 4           # n_heads

    key = jax.random.PRNGKey(0)
    kx, kw, kb = jax.random.split(key, 3)

    # Deterministic init mirroring reset_parameters():
    # kaiming_uniform_(a=sqrt(5)) on (H, out, in) -> U(-1/sqrt(fan_in), 1/sqrt(fan_in))
    # with PyTorch fan_in = out*in for a 3D tensor.
    fan_in = OUT_F * IN_F
    bound = 1.0 / math.sqrt(fan_in)
    weight = jax.random.uniform(kw, (H, OUT_F, IN_F), jnp.float32,
                                minval=-bound, maxval=bound)
    bias = jax.random.uniform(kb, (H, OUT_F), jnp.float32,
                              minval=-bound, maxval=bound)
    x = jax.random.normal(kx, (N, IN_F), jnp.float32)

    # Pure-JAX reference: y[h] = x @ W[h]^T + b[h]
    ref = jnp.einsum("ni,hoi->hno", x, weight) + bias[:, None, :]

    # 1) Auto-tiled path (full-K, scratch-free kernel, f32 HIGHEST precision).
    out = jax.block_until_ready(multihead_linear(x, weight, bias))
    assert out.shape == (H, N, OUT_F)
    assert jnp.allclose(out, ref, atol=1e-5, rtol=1e-5), \
        float(jnp.max(jnp.abs(out - ref)))

    # 2) Explicit small tiles: exercises the multi-K accumulator kernel
    #    (init / accumulate / finalize) and the multi-block parallel grid.
    out_sm = jax.block_until_ready(
        multihead_linear(x, weight, bias, tm=16, tn=128, tk=128))
    assert out_sm.shape == (H, N, OUT_F)
    assert jnp.allclose(out_sm, ref, atol=1e-5, rtol=1e-5), \
        float(jnp.max(jnp.abs(out_sm - ref)))

    # 3) bf16 compute path (v5e/v6e MXU throughput), f32 accumulation.
    out_bf16 = jax.block_until_ready(
        multihead_linear(x, weight, bias, compute_dtype=jnp.bfloat16))
    assert out_bf16.shape == (H, N, OUT_F)
    assert jnp.allclose(out_bf16, ref, atol=2e-2, rtol=2e-2), \
        float(jnp.max(jnp.abs(out_bf16 - ref)))

    # 4) Pre-packed static-weight fast path (repack hoisted out of the call).
    w_packed = pack_multihead_weight(weight)
    out_pk = jax.block_until_ready(
        multihead_linear(x, w_packed, bias, n_heads=H, out_features=OUT_F))
    assert out_pk.shape == (H, N, OUT_F)
    assert jnp.allclose(out_pk, ref, atol=1e-5, rtol=1e-5), \
        float(jnp.max(jnp.abs(out_pk - ref)))

    print("KERNEL_OK")
</pallas_src>

<mosaic_0001>
module attributes {stable_mosaic.version = 11 : i64} {
  func.func @_mhl_kernel_single_k(%arg0: i32, %arg1: i32, %arg2: memref<16x256xf32, #tpu.memory_space<vmem>>, %arg3: memref<256x128xf32, #tpu.memory_space<vmem>>, %arg4: memref<1x128xf32, #tpu.memory_space<vmem>>, %arg5: memref<16x128xf32, #tpu.memory_space<vmem>>) attributes {dimension_semantics = [#tpu.dimension_semantics<parallel>, #tpu.dimension_semantics<parallel>], iteration_bounds = array<i64: 1, 2>, scalar_prefetch = 0 : i64, scratch_operands = 0 : i64, tpu.core_type = #tpu.core_type<tc>, window_params = [{transform_indices = @transform_0, window_bounds = array<i64: 16, 256>}, {transform_indices = @transform_1, window_bounds = array<i64: 256, 128>}, {transform_indices = @transform_2, window_bounds = array<i64: 1, 128>}, {transform_indices = @transform_3, window_bounds = array<i64: 16, 128>}]} {
    %c0 = arith.constant 0 : index
    %c0_0 = arith.constant 0 : index
    %0 = vector.load %arg2[%c0, %c0_0] : memref<16x256xf32, #tpu.memory_space<vmem>>, vector<16x256xf32>
    %c0_1 = arith.constant 0 : index
    %c0_2 = arith.constant 0 : index
    %1 = vector.load %arg3[%c0_1, %c0_2] : memref<256x128xf32, #tpu.memory_space<vmem>>, vector<256x128xf32>
    %cst = arith.constant dense<0.000000e+00> : vector<16x128xf32>
    %2 = tpu.matmul %0, %1, %cst {dimension_numbers = #tpu.dot_dimension_numbers<[1], [0], [0], [1], [0, 0, 1, 1], [], []>, precision = #tpu.contract_precision<fp32>} : vector<16x256xf32>, vector<256x128xf32>, vector<16x128xf32> -> vector<16x128xf32>
    %c0_3 = arith.constant 0 : index
    %c0_4 = arith.constant 0 : index
    %3 = vector.load %arg4[%c0_3, %c0_4] : memref<1x128xf32, #tpu.memory_space<vmem>>, vector<1x128xf32>
    %4 = vector.broadcast %3 : vector<1x128xf32> to vector<16x128xf32>
    %5 = arith.addf %2, %4 : vector<16x128xf32>
    %c0_5 = arith.constant 0 : index
    %c0_6 = arith.constant 0 : index
    %6 = vector.load %arg5[%c0_5, %c0_6] : memref<16x128xf32, #tpu.memory_space<vmem>>, vector<16x128xf32>
    tpu.vector_store %arg5[%c0_5, %c0_6], %5 {strides = array<i32>} : memref<16x128xf32, #tpu.memory_space<vmem>>, vector<16x128xf32>,
    return
  }
  func.func @transform_0(%arg0: i32, %arg1: i32) -> (i32, i32) {
    %c0_i32 = arith.constant 0 : i32
    %c0_i32_0 = arith.constant 0 : i32
    return %arg0, %c0_i32 : i32, i32
  }
  func.func @transform_1(%arg0: i32, %arg1: i32) -> (i32, i32) {
    %c0_i32 = arith.constant 0 : i32
    %c0_i32_0 = arith.constant 0 : i32
    return %c0_i32, %arg1 : i32, i32
  }
  func.func @transform_2(%arg0: i32, %arg1: i32) -> (i32, i32) {
    %c0_i32 = arith.constant 0 : i32
    %c0_i32_0 = arith.constant 0 : i32
    return %c0_i32, %arg1 : i32, i32
  }
  func.func @transform_3(%arg0: i32, %arg1: i32) -> (i32, i32) {
    %c0_i32 = arith.constant 0 : i32
    return %arg0, %arg1 : i32, i32
  }
}

</mosaic_0001>

<llo_original>
// kernel: tpu_custom_call.1
$region0: #{tpu_custom_call.1}
  #allocation0 [shape = 'u32[]', space=smem, size = 0x4, offset = 0x4, fixed_abs, tag = 'smem constant byte address 0x4 - core index']
  #allocation1 [shape = 'u32[72,128]{1,0:T(1,128)}', space=vmem, size = 0x9000, scoped, tag = 'internal scratch']
  %s0 = inlined_call_operand.hbm [shape: f32[16,256], index: 0, kind: input, shape index: {}]
  %s1 = inlined_call_operand.hbm [shape: f32[256,256], index: 1, kind: input, shape index: {}]
  %s2 = inlined_call_operand.hbm [shape: f32[1,256], index: 2, kind: input, shape index: {}]
  %s3 = inlined_call_operand.hbm [shape: f32[16,256], index: 3, kind: output, shape index: {}]
  %s4 = sld [smem:[#allocation0]]
  $region57: #{tpu_custom_call.1} parent=0
    _
  %s6 = ssub.s32 1, %s4
  %s7 = scalar_select 0, %s6, %s4
  $region1: #{tpu_custom_call.1} parent=0
    #allocation2 [shape = 'u8[16384]{0}', space=vmem, size = 0x4000, scoped, tag = 'input window, operand 0, single buffered']
    #allocation3 [shape = 's32[2]{0}', space=sflag, size = 0x8, scoped, tag = 'scoped memory for tpu_custom_call.1']
    #allocation4 [shape = 's32[2]{0}', space=sflag, size = 0x8, scoped, tag = 'scoped memory for tpu_custom_call.1']
    #allocation5 [shape = 'u8[262144]{0}', space=vmem, size = 0x40000, scoped, tag = 'input window, operand 1']
    #allocation6 [shape = 's32[2]{0}', space=sflag, size = 0x8, scoped, tag = 'scoped memory for tpu_custom_call.1']
    #allocation7 [shape = 'u8[1024]{0}', space=vmem, size = 0x400, scoped, tag = 'input window, operand 2']
    #allocation8 [shape = 'u8[16384]{0}', space=vmem, size = 0x4000, scoped, tag = 'output window, operand 0']
    %8 = vsyncpa [#allocation3], 0
    %9 = vsyncpa [#allocation6], 0
    %s10 = scalar_lea.sflag [#allocation6], 1
    %11 = vsyncpa %s10, 0
    %12 = vsyncpa [#allocation4], 0
    %s13 = scalar_lea.sflag [#allocation4], 1
    %14 = vsyncpa %s13, 0
    loop: start=0, step=1, limit=4
    $region2: #{tpu_custom_call.1} parent=1 // loop_pre_header
      _
    $region3: #{tpu_custom_call.1} parent=1 // loop_header
      %s16 = sphi 0, %s20
      %p17 = scmp.ge.s32.totalorder %s16, 4
      %s23 = sphi 0, %s35
      %s24 = sphi 0, %s31
      %s25 = sphi 0, %s23
      %s26 = sphi 0, %s24
      %s27 = sphi 0, %s25
      %s28 = sphi 0, %s26
      %s38 = sphi 0, %s40
      %s41 = sphi 0, %s38
      %s42 = sphi 0, %s41
      %s58 = sphi 0, %s42
      %s64 = sphi 0, %s66
      %s67 = sphi 0, %s64
      %s68 = sphi 0, %s67
      %s84 = sphi 0, %s68
      %s90 = sphi 0, %s92
      %s93 = sphi 0, %s90
      %s94 = sphi 0, %s93
      %s110 = sphi 0, %s94
      %s118 = sphi 0, %s120
      %s121 = sphi 0, %s118
      %s122 = sphi 0, %s121
      %s138 = sphi 0, %s122
    $region4: #{tpu_custom_call.1} parent=1 // loop_header_branch
      %19 = sbr.rel (%p17) target = $region8
    $region5: #{tpu_custom_call.1} parent=1 // loop_body
      %s21 = ssub.s32 %s16, 1
      %s22 = ssub.s32 %s16, 2
      %s29 = sadd.s32 1, %s24
      %p30 = scmp.ge.s32.totalorder %s29, 2
      %s31 = scalar_select %p30, 0, %s29
      %s32 = sadd.s32 1, %s23
      %s33 = scalar_select %p30, %s32, %s23
      %p34 = scmp.ge.s32.totalorder %s33, 1
      %s35 = scalar_select %p34, 0, %s33
      %s36 = ssub.s32 %s23, %s35
      %p37 = scmp.eq.s32.totalorder %s36, 0
      %s39 = sadd.s32 %s38, 1
      %s40 = scalar_select %p37, %s38, %s39
      %p43 = pneg %p37
      %p44 = scmp.eq.s32.totalorder %s16, 1
      %p45 = por %p43, %p44
      %p46 = scmp.ne.s32.totalorder %s38, %s41
      %p47 = scmp.eq.s32.totalorder %s16, 0
      %p48 = por %p46, %p47
      %p49 = scmp.ne.s32.totalorder %s38, %s41
      %p50 = scmp.eq.s32.totalorder %s21, 1
      %p51 = por %p49, %p50
      %p52 = scmp.ne.s32.totalorder %s41, %s42
      %p53 = scmp.eq.s32.totalorder %s21, 0
      %p54 = por %p52, %p53
      %p55 = scmp.ne.s32.totalorder %s41, %s42
      %p56 = scmp.eq.s32.totalorder %s22, 1
      %p57 = por %p55, %p56
      %p59 = scmp.ne.s32.totalorder %s42, %s58
      %p60 = scmp.eq.s32.totalorder %s22, 0
      %p61 = por %p59, %p60
      %s62 = ssub.s32 %s24, %s31
      %p63 = scmp.eq.s32.totalorder %s62, 0
      %s65 = sadd.s32 %s64, 1
      %s66 = scalar_select %p63, %s64, %s65
      %p69 = pneg %p63
      %p70 = scmp.eq.s32.totalorder %s16, 1
      %p71 = por %p69, %p70
      %p72 = scmp.ne.s32.totalorder %s64, %s67
      %p73 = scmp.eq.s32.totalorder %s16, 0
      %p74 = por %p72, %p73
      %p75 = scmp.ne.s32.totalorder %s64, %s67
      %p76 = scmp.eq.s32.totalorder %s21, 1
      %p77 = por %p75, %p76
      %p78 = scmp.ne.s32.totalorder %s67, %s68
      %p79 = scmp.eq.s32.totalorder %s21, 0
      %p80 = por %p78, %p79
      %p81 = scmp.ne.s32.totalorder %s67, %s68
      %p82 = scmp.eq.s32.totalorder %s22, 1
      %p83 = por %p81, %p82
      %p85 = scmp.ne.s32.totalorder %s68, %s84
      %p86 = scmp.eq.s32.totalorder %s22, 0
      %p87 = por %p85, %p86
      %s88 = ssub.s32 %s24, %s31
      %p89 = scmp.eq.s32.totalorder %s88, 0
      %s91 = sadd.s32 %s90, 1
      %s92 = scalar_select %p89, %s90, %s91
      %p95 = pneg %p89
      %p96 = scmp.eq.s32.totalorder %s16, 1
      %p97 = por %p95, %p96
      %p98 = scmp.ne.s32.totalorder %s90, %s93
      %p99 = scmp.eq.s32.totalorder %s16, 0
      %p100 = por %p98, %p99
      %p101 = scmp.ne.s32.totalorder %s90, %s93
      %p102 = scmp.eq.s32.totalorder %s21, 1
      %p103 = por %p101, %p102
      %p104 = scmp.ne.s32.totalorder %s93, %s94
      %p105 = scmp.eq.s32.totalorder %s21, 0
      %p106 = por %p104, %p105
      %p107 = scmp.ne.s32.totalorder %s93, %s94
      %p108 = scmp.eq.s32.totalorder %s22, 1
      %p109 = por %p107, %p108
      %p111 = scmp.ne.s32.totalorder %s94, %s110
      %p112 = scmp.eq.s32.totalorder %s22, 0
      %p113 = por %p111, %p112
      %s114 = ssub.s32 %s23, %s35
      %s115 = ssub.s32 %s24, %s31
      %s116 = sor.u32 %s114, %s115
      %p117 = scmp.eq.s32.totalorder %s116, 0
      %s119 = sadd.s32 %s118, 1
      %s120 = scalar_select %p117, %s118, %s119
      %p123 = pneg %p117
      %p124 = scmp.eq.s32.totalorder %s16, 1
      %p125 = por %p123, %p124
      %p126 = scmp.ne.s32.totalorder %s118, %s121
      %p127 = scmp.eq.s32.totalorder %s16, 0
      %p128 = por %p126, %p127
      %p129 = scmp.ne.s32.totalorder %s118, %s121
      %p130 = scmp.eq.s32.totalorder %s21, 1
      %p131 = por %p129, %p130
      %p132 = scmp.ne.s32.totalorder %s121, %s122
      %p133 = scmp.eq.s32.totalorder %s21, 0
      %p134 = por %p132, %p133
      %p135 = scmp.ne.s32.totalorder %s121, %s122
      %p136 = scmp.eq.s32.totalorder %s22, 1
      %p137 = por %p135, %p136
      %p139 = scmp.ne.s32.totalorder %s122, %s138
      %p140 = scmp.eq.s32.totalorder %s22, 0
      %p141 = por %p139, %p140
      %p142 = scmp.le.s32.totalorder 1, %s16
      %p143 = scmp.lt.s32.totalorder %s16, 3
      %p144 = pnand %p142, %p143
      %p145 = pneg %p144
      // Predicated region
      $region9: #{tpu_custom_call.1} parent=5 // pred_check
        _
      $region10: #{tpu_custom_call.1} parent=5 // pred_check_branch
        %147 = sbr.rel (%p144) target = $region12
      $region11: #{tpu_custom_call.1} parent=5 // pred_region
        %s148 = ssub.s32 %s16, 1
        // Predicated region
        $region13: #{tpu_custom_call.1} parent=11 // pred_check
          %p149 = pneg %p54
        $region14: #{tpu_custom_call.1} parent=11 // pred_check_branch
          %151 = sbr.rel (%p149) target = $region16
        $region15: #{tpu_custom_call.1} parent=11 // pred_region
          %s152 = smul.u32 2, %s25
          %154 = vsyncadd [#allocation3], 0
          %s155 = smul.addr %s152, 2
          %s156 = smul.addr %s155, 8
          %s157 = scalar_lea.hbm %s0, %s156
          %s158 = sshll.u32 %s157, 4
          %s159 = int_to_ptr.hbm [resolvable:$true] %s158
          %s160 = sshll.u32 [#allocation2], 4
          %s161 = int_to_ptr.vmem [resolvable:$true] %s160
          %166 = dma.hbm_to_vmem [thread:$0]  %s159, 512, %s161, [#allocation3], 256, 256, 16
        $region16: #{tpu_custom_call.1} parent=11 // pred_fallthru
          _
      $region12: #{tpu_custom_call.1} parent=5 // pred_fallthru
        _
      %p167 = scmp.lt.s32.totalorder %s16, 2
      // Predicated region
      $region17: #{tpu_custom_call.1} parent=5 // pred_check
        %p168 = pneg %p167
      $region18: #{tpu_custom_call.1} parent=5 // pred_check_branch
        %170 = sbr.rel (%p168) target = $region20
      $region19: #{tpu_custom_call.1} parent=5 // pred_region
        // Predicated region
        $region21: #{tpu_custom_call.1} parent=19 // pred_check
          %p171 = pneg %p74
        $region22: #{tpu_custom_call.1} parent=19 // pred_check_branch
          %173 = sbr.rel (%p171) target = $region24
        $region23: #{tpu_custom_call.1} parent=19 // pred_region
          %s174 = sand.u32 %s16, 1
          %s175 = scalar_lea.sflag [#allocation6], %s174
          %s176 = sand.u32 %s64, 1
          %s177 = smul.addr %s176, 256
          %s178 = scalar_lea.vmem [#allocation5], %s177
          %180 = vsyncadd %s175, 0
          %s181 = smul.addr %s24, 8
          %s182 = scalar_lea.hbm %s1, %s181
          %s183 = sshll.u32 %s182, 4
          %s184 = int_to_ptr.hbm [resolvable:$true] %s183
          %s185 = sshll.u32 %s178, 4
          %s186 = int_to_ptr.vmem [resolvable:$true] %s185
          %191 = dma.hbm_to_vmem [thread:$0]  %s184, 4096, %s186, %s175, 256, 128, 8
        $region24: #{tpu_custom_call.1} parent=19 // pred_fallthru
          _
        // Predicated region
        $region25: #{tpu_custom_call.1} parent=19 // pred_check
          %p192 = pneg %p100
        $region26: #{tpu_custom_call.1} parent=19 // pred_check_branch
          %194 = sbr.rel (%p192) target = $region28
        $region27: #{tpu_custom_call.1} parent=19 // pred_region
          %s195 = sand.u32 %s16, 1
          %s196 = scalar_lea.sflag [#allocation6], %s195
          %s197 = sand.u32 %s90, 1
          %s198 = scalar_lea.vmem [#allocation7], %s197
          %200 = vsyncadd %s196, 0
          %s201 = scalar_lea.hbm %s2, %s24
          %s203 = sshll.u32 %s201, 4
          %s204 = int_to_ptr.hbm [resolvable:$true] %s203
          %s205 = sshll.u32 %s198, 4
          %s206 = int_to_ptr.vmem [resolvable:$true] %s205
          %208 = dma.hbm_to_vmem [thread:$0]  %s204, 16, %s206, %s196
        $region28: #{tpu_custom_call.1} parent=19 // pred_fallthru
          _
      $region20: #{tpu_custom_call.1} parent=5 // pred_fallthru
        _
      %p209 = scmp.le.s32.totalorder 1, %s16
      %p210 = scmp.lt.s32.totalorder %s16, 3
      %p211 = pnand %p209, %p210
      %p212 = pneg %p211
      // Predicated region
      $region29: #{tpu_custom_call.1} parent=5 // pred_check
        _
      $region30: #{tpu_custom_call.1} parent=5 // pred_check_branch
        %214 = sbr.rel (%p211) target = $region32
      $region31: #{tpu_custom_call.1} parent=5 // pred_region
        %s215 = ssub.s32 %s16, 1
        // Predicated region
        $region33: #{tpu_custom_call.1} parent=31 // pred_check
          %p216 = pneg %p54
        $region34: #{tpu_custom_call.1} parent=31 // pred_check_branch
          %218 = sbr.rel (%p216) target = $region36
        $region35: #{tpu_custom_call.1} parent=31 // pred_region
          %220 = dma.done [#allocation3], 512
        $region36: #{tpu_custom_call.1} parent=31 // pred_fallthru
          _
        %s221 = sand.u32 %s21, 1
        %s222 = scalar_lea.sflag [#allocation6], %s221
        %s223 = sand.u32 %s67, 1
        %s224 = smul.addr %s223, 256
        %s225 = scalar_lea.vmem [#allocation5], %s224
        // Predicated region
        $region37: #{tpu_custom_call.1} parent=31 // pred_check
          %p226 = pneg %p80
        $region38: #{tpu_custom_call.1} parent=31 // pred_check_branch
          %228 = sbr.rel (%p226) target = $region40
        $region39: #{tpu_custom_call.1} parent=31 // pred_region
          %230 = dma.done %s222, 4096
        $region40: #{tpu_custom_call.1} parent=31 // pred_fallthru
          _
        %s231 = sand.u32 %s21, 1
        %s232 = scalar_lea.sflag [#allocation6], %s231
        %s233 = sand.u32 %s93, 1
        %s234 = scalar_lea.vmem [#allocation7], %s233
        // Predicated region
        $region41: #{tpu_custom_call.1} parent=31 // pred_check
          %p235 = pneg %p106
        $region42: #{tpu_custom_call.1} parent=31 // pred_check_branch
          %237 = sbr.rel (%p235) target = $region44
        $region43: #{tpu_custom_call.1} parent=31 // pred_region
          %239 = dma.done %s232, 16
        $region44: #{tpu_custom_call.1} parent=31 // pred_fallthru
          _
        %p240 = pneg %p54
        %p241 = pneg %p51
        %s242 = sand.u32 %s21, 1
        %s243 = scalar_lea.sflag [#allocation6], %s242
        %s244 = sand.u32 %s67, 1
        %s245 = smul.addr %s244, 256
        %s246 = scalar_lea.vmem [#allocation5], %s245
        %p247 = pneg %p80
        %p248 = pneg %p77
        %s249 = sand.u32 %s21, 1
        %s250 = scalar_lea.sflag [#allocation6], %s249
        %s251 = sand.u32 %s93, 1
        %s252 = scalar_lea.vmem [#allocation7], %s251
        %p253 = pneg %p106
        %p254 = pneg %p103
        %p255 = pneg %p134
        %p256 = pneg %p131
        %s257 = sand.u32 %s121, 1
        %s258 = scalar_lea.sflag [#allocation4], %s257
        %s259 = sand.u32 %s121, 1
        %s260 = smul.addr %s259, 16
        %s261 = scalar_lea.vmem [#allocation8], %s260
        %s262 = smul.u32 2, %s25
        %s263 = smul.u32 2, %s25
        %v264 = vld [vmem:[#allocation2] sm:$0xff]
        %v265 = vld [vmem:[#allocation2 + $0x8] sm:$0xff]
        %v266 = vld [vmem:[#allocation2 + $0x10] sm:$0xff]
        %v267 = vld [vmem:[#allocation2 + $0x18] sm:$0xff]
        %v268 = vld [vmem:[%s225] sm:$0xff]
        %v269 = vld [vmem:[%s225 + $0x8] sm:$0xff]
        %v270 = vld [vmem:[%s225 + $0x10] sm:$0xff]
        %v271 = vld [vmem:[%s225 + $0x18] sm:$0xff]
        %v272 = vld [vmem:[%s225 + $0x20] sm:$0xff]
        %v273 = vld [vmem:[%s225 + $0x28] sm:$0xff]
        %v274 = vld [vmem:[%s225 + $0x30] sm:$0xff]
        %v275 = vld [vmem:[%s225 + $0x38] sm:$0xff]
        %v276 = vld [vmem:[%s225 + $0x40] sm:$0xff]
        %v277 = vld [vmem:[%s225 + $0x48] sm:$0xff]
        %v278 = vld [vmem:[%s225 + $0x50] sm:$0xff]
        %v279 = vld [vmem:[%s225 + $0x58] sm:$0xff]
        %v280 = vld [vmem:[%s225 + $0x60] sm:$0xff]
        %v281 = vld [vmem:[%s225 + $0x68] sm:$0xff]
        %v282 = vld [vmem:[%s225 + $0x70] sm:$0xff]
        %v283 = vld [vmem:[%s225 + $0x78] sm:$0xff]
        %v284 = vld [vmem:[%s225 + $0x80] sm:$0xff]
        %v285 = vld [vmem:[%s225 + $0x88] sm:$0xff]
        %v286 = vld [vmem:[%s225 + $0x90] sm:$0xff]
        %v287 = vld [vmem:[%s225 + $0x98] sm:$0xff]
        %v288 = vld [vmem:[%s225 + $0xa0] sm:$0xff]
        %v289 = vld [vmem:[%s225 + $0xa8] sm:$0xff]
        %v290 = vld [vmem:[%s225 + $0xb0] sm:$0xff]
        %v291 = vld [vmem:[%s225 + $0xb8] sm:$0xff]
        %v292 = vld [vmem:[%s225 + $0xc0] sm:$0xff]
        %v293 = vld [vmem:[%s225 + $0xc8] sm:$0xff]
        %v294 = vld [vmem:[%s225 + $0xd0] sm:$0xff]
        %v295 = vld [vmem:[%s225 + $0xd8] sm:$0xff]
        %v296 = vld [vmem:[%s225 + $0xe0] sm:$0xff]
        %v297 = vld [vmem:[%s225 + $0xe8] sm:$0xff]
        %v298 = vld [vmem:[%s225 + $0xf0] sm:$0xff]
        %v299 = vld [vmem:[%s225 + $0xf8] sm:$0xff]
        %v300 = vld [vmem:[%s234] sm:$0x1]
        %v302 = vperm.slane %v300, 0
        %v304 = vand.u32 %v283, 4294901760
        %305 = vmatpush.msra.mxu0 %v304
        %v306 = vand.u32 %v282, 4294901760
        %307 = vmatpush.msra.mxu0 %v306
        %v308 = vand.u32 %v281, 4294901760
        %309 = vmatpush.msra.mxu0 %v308
        %v310 = vand.u32 %v280, 4294901760
        %311 = vmatpush.msra.mxu0 %v310
        %v312 = vand.u32 %v279, 4294901760
        %313 = vmatpush.msra.mxu0 %v312
        %v314 = vand.u32 %v278, 4294901760
        %315 = vmatpush.msra.mxu0 %v314
        %v316 = vand.u32 %v277, 4294901760
        %317 = vmatpush.msra.mxu0 %v316
        %v318 = vand.u32 %v276, 4294901760
        %319 = vmatpush.msra.mxu0 %v318
        %v320 = vand.u32 %v275, 4294901760
        %321 = vmatpush.msra.mxu0 %v320
        %v322 = vand.u32 %v274, 4294901760
        %323 = vmatpush.msra.mxu0 %v322
        %v324 = vand.u32 %v273, 4294901760
        %325 = vmatpush.msra.mxu0 %v324
        %v326 = vand.u32 %v272, 4294901760
        %327 = vmatpush.msra.mxu0 %v326
        %v328 = vand.u32 %v271, 4294901760
        %329 = vmatpush.msra.mxu0 %v328
        %v330 = vand.u32 %v270, 4294901760
        %331 = vmatpush.msra.mxu0 %v330
        %v332 = vand.u32 %v269, 4294901760
        %333 = vmatpush.msra.mxu0 %v332
        %v334 = vand.u32 %v268, 4294901760
        %335 = vmatpush.msra.mxu0 %v334
        %v336 = vand.u32 %v264, 4294901760
        %v337 = vsub.f32 %v264, %v336
        %v338 = vand.u32 %v337, 4294901760
        %v339 = vsub.f32 %v337, %v338
        %v340 = vand.u32 %v339, 4294901760
        %341 = vmatmul.f32.gmra.mxu0 %v340
        %v342 = vpop.f32.mrf.mxu0
        %v343 = vadd.f32 %v302, %v342
        %v344 = vand.u32 %v266, 4294901760
        %v345 = vsub.f32 %v266, %v344
        %v346 = vand.u32 %v345, 4294901760
        %v347 = vsub.f32 %v345, %v346
        %v348 = vand.u32 %v347, 4294901760
        %349 = vmatmul.f32.gmra.mxu0 %v348
        %v350 = vpop.f32.mrf.mxu0
        %v351 = vadd.f32 %v302, %v350
        %352 = vdwg.mxu0
        %v353 = vand.u32 %v283, 4294901760
        %v354 = vsub.f32 %v283, %v353
        %v355 = vand.u32 %v354, 4294901760
        %v356 = vsub.f32 %v354, %v355
        %v357 = vand.u32 %v356, 4294901760
        %358 = vmatpush.msra.mxu0 %v357
        %v359 = vand.u32 %v282, 4294901760
        %v360 = vsub.f32 %v282, %v359
        %v361 = vand.u32 %v360, 4294901760
        %v362 = vsub.f32 %v360, %v361
        %v363 = vand.u32 %v362, 4294901760
        %364 = vmatpush.msra.mxu0 %v363
        %v365 = vand.u32 %v281, 4294901760
        %v366 = vsub.f32 %v281, %v365
        %v367 = vand.u32 %v366, 4294901760
        %v368 = vsub.f32 %v366, %v367
        %v369 = vand.u32 %v368, 4294901760
        %370 = vmatpush.msra.mxu0 %v369
        %v371 = vand.u32 %v280, 4294901760
        %v372 = vsub.f32 %v280, %v371
        %v373 = vand.u32 %v372, 4294901760
        %v374 = vsub.f32 %v372, %v373
        %v375 = vand.u32 %v374, 4294901760
        %376 = vmatpush.msra.mxu0 %v375
        %v377 = vand.u32 %v279, 4294901760
        %v378 = vsub.f32 %v279, %v377
        %v379 = vand.u32 %v378, 4294901760
        %v380 = vsub.f32 %v378, %v379
        %v381 = vand.u32 %v380, 4294901760
        %382 = vmatpush.msra.mxu0 %v381
        %v383 = vand.u32 %v278, 4294901760
        %v384 = vsub.f32 %v278, %v383
        %v385 = vand.u32 %v384, 4294901760
        %v386 = vsub.f32 %v384, %v385
        %v387 = vand.u32 %v386, 4294901760
        %388 = vmatpush.msra.mxu0 %v387
        %v389 = vand.u32 %v277, 4294901760
        %v390 = vsub.f32 %v277, %v389
        %v391 = vand.u32 %v390, 4294901760
        %v392 = vsub.f32 %v390, %v391
        %v393 = vand.u32 %v392, 4294901760
        %394 = vmatpush.msra.mxu0 %v393
        %v395 = vand.u32 %v276, 4294901760
        %v396 = vsub.f32 %v276, %v395
        %v397 = vand.u32 %v396, 4294901760
        %v398 = vsub.f32 %v396, %v397
        %v399 = vand.u32 %v398, 4294901760
        %400 = vmatpush.msra.mxu0 %v399
        %v401 = vand.u32 %v275, 4294901760
        %v402 = vsub.f32 %v275, %v401
        %v403 = vand.u32 %v402, 4294901760
        %v404 = vsub.f32 %v402, %v403
        %v405 = vand.u32 %v404, 4294901760
        %406 = vmatpush.msra.mxu0 %v405
        %v407 = vand.u32 %v274, 4294901760
        %v408 = vsub.f32 %v274, %v407
        %v409 = vand.u32 %v408, 4294901760
        %v410 = vsub.f32 %v408, %v409
        %v411 = vand.u32 %v410, 4294901760
        %412 = vmatpush.msra.mxu0 %v411
        %v413 = vand.u32 %v273, 4294901760
        %v414 = vsub.f32 %v273, %v413
        %v415 = vand.u32 %v414, 4294901760
        %v416 = vsub.f32 %v414, %v415
        %v417 = vand.u32 %v416, 4294901760
        %418 = vmatpush.msra.mxu0 %v417
        %v419 = vand.u32 %v272, 4294901760
        %v420 = vsub.f32 %v272, %v419
        %v421 = vand.u32 %v420, 4294901760
        %v422 = vsub.f32 %v420, %v421
        %v423 = vand.u32 %v422, 4294901760
        %424 = vmatpush.msra.mxu0 %v423
        %v425 = vand.u32 %v271, 4294901760
        %v426 = vsub.f32 %v271, %v425
        %v427 = vand.u32 %v426, 4294901760
        %v428 = vsub.f32 %v426, %v427
        %v429 = vand.u32 %v428, 4294901760
        %430 = vmatpush.msra.mxu0 %v429
        %v431 = vand.u32 %v270, 4294901760
        %v432 = vsub.f32 %v270, %v431
        %v433 = vand.u32 %v432, 4294901760
        %v434 = vsub.f32 %v432, %v433
        %v435 = vand.u32 %v434, 4294901760
        %436 = vmatpush.msra.mxu0 %v435
        %v437 = vand.u32 %v269, 4294901760
        %v438 = vsub.f32 %v269, %v437
        %v439 = vand.u32 %v438, 4294901760
        %v440 = vsub.f32 %v438, %v439
        %v441 = vand.u32 %v440, 4294901760
        %442 = vmatpush.msra.mxu0 %v441
        %v443 = vand.u32 %v268, 4294901760
        %v444 = vsub.f32 %v268, %v443
        %v445 = vand.u32 %v444, 4294901760
        %v446 = vsub.f32 %v444, %v445
        %v447 = vand.u32 %v446, 4294901760
        %448 = vmatpush.msra.mxu0 %v447
        %v449 = vand.u32 %v264, 4294901760
        %450 = vmatmul.f32.gmra.mxu0 %v449
        %v451 = vpop.f32.mrf.mxu0
        %v452 = vadd.f32 %v343, %v451
        %v453 = vand.u32 %v266, 4294901760
        %454 = vmatmul.f32.gmra.mxu0 %v453
        %v455 = vpop.f32.mrf.mxu0
        %v456 = vadd.f32 %v351, %v455
        %457 = vdwg.mxu0
        %v458 = vand.u32 %v283, 4294901760
        %v459 = vsub.f32 %v283, %v458
        %460 = vmatpush.msra.mxu0 %v459
        %v461 = vand.u32 %v282, 4294901760
        %v462 = vsub.f32 %v282, %v461
        %463 = vmatpush.msra.mxu0 %v462
        %v464 = vand.u32 %v281, 4294901760
        %v465 = vsub.f32 %v281, %v464
        %466 = vmatpush.msra.mxu0 %v465
        %v467 = vand.u32 %v280, 4294901760
        %v468 = vsub.f32 %v280, %v467
        %469 = vmatpush.msra.mxu0 %v468
        %v470 = vand.u32 %v279, 4294901760
        %v471 = vsub.f32 %v279, %v470
        %472 = vmatpush.msra.mxu0 %v471
        %v473 = vand.u32 %v278, 4294901760
        %v474 = vsub.f32 %v278, %v473
        %475 = vmatpush.msra.mxu0 %v474
        %v476 = vand.u32 %v277, 4294901760
        %v477 = vsub.f32 %v277, %v476
        %478 = vmatpush.msra.mxu0 %v477
        %v479 = vand.u32 %v276, 4294901760
        %v480 = vsub.f32 %v276, %v479
        %481 = vmatpush.msra.mxu0 %v480
        %v482 = vand.u32 %v275, 4294901760
        %v483 = vsub.f32 %v275, %v482
        %484 = vmatpush.msra.mxu0 %v483
        %v485 = vand.u32 %v274, 4294901760
        %v486 = vsub.f32 %v274, %v485
        %487 = vmatpush.msra.mxu0 %v486
        %v488 = vand.u32 %v273, 4294901760
        %v489 = vsub.f32 %v273, %v488
        %490 = vmatpush.msra.mxu0 %v489
        %v491 = vand.u32 %v272, 4294901760
        %v492 = vsub.f32 %v272, %v491
        %493 = vmatpush.msra.mxu0 %v492
        %v494 = vand.u32 %v271, 4294901760
        %v495 = vsub.f32 %v271, %v494
        %496 = vmatpush.msra.mxu0 %v495
        %v497 = vand.u32 %v270, 4294901760
        %v498 = vsub.f32 %v270, %v497
        %499 = vmatpush.msra.mxu0 %v498
        %v500 = vand.u32 %v269, 4294901760
        %v501 = vsub.f32 %v269, %v500
        %502 = vmatpush.msra.mxu0 %v501
        %v503 = vand.u32 %v268, 4294901760
        %v504 = vsub.f32 %v268, %v503
        %505 = vmatpush.msra.mxu0 %v504
        %v506 = vand.u32 %v264, 4294901760
        %v507 = vsub.f32 %v264, %v506
        %508 = vmatmul.f32.gmra.mxu0 %v507
        %v509 = vpop.f32.mrf.mxu0
        %v510 = vadd.f32 %v452, %v509
        %v511 = vand.u32 %v266, 4294901760
        %v512 = vsub.f32 %v266, %v511
        %513 = vmatmul.f32.gmra.mxu0 %v512
        %v514 = vpop.f32.mrf.mxu0
        %v515 = vadd.f32 %v456, %v514
        %516 = vdwg.mxu0
        %v517 = vand.u32 %v283, 4294901760
        %518 = vmatpush.msra.mxu0 %v517
        %v519 = vand.u32 %v282, 4294901760
        %520 = vmatpush.msra.mxu0 %v519
        %v521 = vand.u32 %v281, 4294901760
        %522 = vmatpush.msra.mxu0 %v521
        %v523 = vand.u32 %v280, 4294901760
        %524 = vmatpush.msra.mxu0 %v523
        %v525 = vand.u32 %v279, 4294901760
        %526 = vmatpush.msra.mxu0 %v525
        %v527 = vand.u32 %v278, 4294901760
        %528 = vmatpush.msra.mxu0 %v527
        %v529 = vand.u32 %v277, 4294901760
        %530 = vmatpush.msra.mxu0 %v529
        %v531 = vand.u32 %v276, 4294901760
        %532 = vmatpush.msra.mxu0 %v531
        %v533 = vand.u32 %v275, 4294901760
        %534 = vmatpush.msra.mxu0 %v533
        %v535 = vand.u32 %v274, 4294901760
        %536 = vmatpush.msra.mxu0 %v535
        %v537 = vand.u32 %v273, 4294901760
        %538 = vmatpush.msra.mxu0 %v537
        %v539 = vand.u32 %v272, 4294901760
        %540 = vmatpush.msra.mxu0 %v539
        %v541 = vand.u32 %v271, 4294901760
        %542 = vmatpush.msra.mxu0 %v541
        %v543 = vand.u32 %v270, 4294901760
        %544 = vmatpush.msra.mxu0 %v543
        %v545 = vand.u32 %v269, 4294901760
        %546 = vmatpush.msra.mxu0 %v545
        %v547 = vand.u32 %v268, 4294901760
        %548 = vmatpush.msra.mxu0 %v547
        %v549 = vand.u32 %v264, 4294901760
        %v550 = vsub.f32 %v264, %v549
        %v551 = vand.u32 %v550, 4294901760
        %552 = vmatmul.f32.gmra.mxu0 %v551
        %v553 = vpop.f32.mrf.mxu0
        %v554 = vadd.f32 %v510, %v553
        %v555 = vand.u32 %v266, 4294901760
        %v556 = vsub.f32 %v266, %v555
        %v557 = vand.u32 %v556, 4294901760
        %558 = vmatmul.f32.gmra.mxu0 %v557
        %v559 = vpop.f32.mrf.mxu0
        %v560 = vadd.f32 %v515, %v559
        %561 = vdwg.mxu0
        %v562 = vand.u32 %v283, 4294901760
        %v563 = vsub.f32 %v283, %v562
        %v564 = vand.u32 %v563, 4294901760
        %565 = vmatpush.msra.mxu0 %v564
        %v566 = vand.u32 %v282, 4294901760
        %v567 = vsub.f32 %v282, %v566
        %v568 = vand.u32 %v567, 4294901760
        %569 = vmatpush.msra.mxu0 %v568
        %v570 = vand.u32 %v281, 4294901760
        %v571 = vsub.f32 %v281, %v570
        %v572 = vand.u32 %v571, 4294901760
        %573 = vmatpush.msra.mxu0 %v572
        %v574 = vand.u32 %v280, 4294901760
        %v575 = vsub.f32 %v280, %v574
        %v576 = vand.u32 %v575, 4294901760
        %577 = vmatpush.msra.mxu0 %v576
        %v578 = vand.u32 %v279, 4294901760
        %v579 = vsub.f32 %v279, %v578
        %v580 = vand.u32 %v579, 4294901760
        %581 = vmatpush.msra.mxu0 %v580
        %v582 = vand.u32 %v278, 4294901760
        %v583 = vsub.f32 %v278, %v582
        %v584 = vand.u32 %v583, 4294901760
        %585 = vmatpush.msra.mxu0 %v584
        %v586 = vand.u32 %v277, 4294901760
        %v587 = vsub.f32 %v277, %v586
        %v588 = vand.u32 %v587, 4294901760
        %589 = vmatpush.msra.mxu0 %v588
        %v590 = vand.u32 %v276, 4294901760
        %v591 = vsub.f32 %v276, %v590
        %v592 = vand.u32 %v591, 4294901760
        %593 = vmatpush.msra.mxu0 %v592
        %v594 = vand.u32 %v275, 4294901760
        %v595 = vsub.f32 %v275, %v594
        %v596 = vand.u32 %v595, 4294901760
        %597 = vmatpush.msra.mxu0 %v596
        %v598 = vand.u32 %v274, 4294901760
        %v599 = vsub.f32 %v274, %v598
        %v600 = vand.u32 %v599, 4294901760
        %601 = vmatpush.msra.mxu0 %v600
        %v602 = vand.u32 %v273, 4294901760
        %v603 = vsub.f32 %v273, %v602
        %v604 = vand.u32 %v603, 4294901760
        %605 = vmatpush.msra.mxu0 %v604
        %v606 = vand.u32 %v272, 4294901760
        %v607 = vsub.f32 %v272, %v606
        %v608 = vand.u32 %v607, 4294901760
        %609 = vmatpush.msra.mxu0 %v608
        %v610 = vand.u32 %v271, 4294901760
        %v611 = vsub.f32 %v271, %v610
        %v612 = vand.u32 %v611, 4294901760
        %613 = vmatpush.msra.mxu0 %v612
        %v614 = vand.u32 %v270, 4294901760
        %v615 = vsub.f32 %v270, %v614
        %v616 = vand.u32 %v615, 4294901760
        %617 = vmatpush.msra.mxu0 %v616
        %v618 = vand.u32 %v269, 4294901760
        %v619 = vsub.f32 %v269, %v618
        %v620 = vand.u32 %v619, 4294901760
        %621 = vmatpush.msra.mxu0 %v620
        %v622 = vand.u32 %v268, 4294901760
        %v623 = vsub.f32 %v268, %v622
        %v624 = vand.u32 %v623, 4294901760
        %625 = vmatpush.msra.mxu0 %v624
        %v626 = vand.u32 %v264, 4294901760
        %627 = vmatmul.f32.gmra.mxu0 %v626
        %v628 = vpop.f32.mrf.mxu0
        %v629 = vadd.f32 %v554, %v628
        %v630 = vand.u32 %v266, 4294901760
        %631 = vmatmul.f32.gmra.mxu0 %v630
        %v632 = vpop.f32.mrf.mxu0
        %v633 = vadd.f32 %v560, %v632
        %634 = vdwg.mxu0
        %v635 = vand.u32 %v283, 4294901760
        %636 = vmatpush.msra.mxu0 %v635
        %v637 = vand.u32 %v282, 4294901760
        %638 = vmatpush.msra.mxu0 %v637
        %v639 = vand.u32 %v281, 4294901760
        %640 = vmatpush.msra.mxu0 %v639
        %v641 = vand.u32 %v280, 4294901760
        %642 = vmatpush.msra.mxu0 %v641
        %v643 = vand.u32 %v279, 4294901760
        %644 = vmatpush.msra.mxu0 %v643
        %v645 = vand.u32 %v278, 4294901760
        %646 = vmatpush.msra.mxu0 %v645
        %v647 = vand.u32 %v277, 4294901760
        %648 = vmatpush.msra.mxu0 %v647
        %v649 = vand.u32 %v276, 4294901760
        %650 = vmatpush.msra.mxu0 %v649
        %v651 = vand.u32 %v275, 4294901760
        %652 = vmatpush.msra.mxu0 %v651
        %v653 = vand.u32 %v274, 4294901760
        %654 = vmatpush.msra.mxu0 %v653
        %v655 = vand.u32 %v273, 4294901760
        %656 = vmatpush.msra.mxu0 %v655
        %v657 = vand.u32 %v272, 4294901760
        %658 = vmatpush.msra.mxu0 %v657
        %v659 = vand.u32 %v271, 4294901760
        %660 = vmatpush.msra.mxu0 %v659
        %v661 = vand.u32 %v270, 4294901760
        %662 = vmatpush.msra.mxu0 %v661
        %v663 = vand.u32 %v269, 4294901760
        %664 = vmatpush.msra.mxu0 %v663
        %v665 = vand.u32 %v268, 4294901760
        %666 = vmatpush.msra.mxu0 %v665
        %v667 = vand.u32 %v264, 4294901760
        %668 = vmatmul.f32.gmra.mxu0 %v667
        %v669 = vpop.f32.mrf.mxu0
        %v670 = vadd.f32 %v629, %v669
        %v671 = vand.u32 %v266, 4294901760
        %672 = vmatmul.f32.gmra.mxu0 %v671
        %v673 = vpop.f32.mrf.mxu0
        %v674 = vadd.f32 %v633, %v673
        %675 = vdwg.mxu0
        %v676 = vand.u32 %v299, 4294901760
        %677 = vmatpush.msra.mxu0 %v676
        %v678 = vand.u32 %v298, 4294901760
        %679 = vmatpush.msra.mxu0 %v678
        %v680 = vand.u32 %v297, 4294901760
        %681 = vmatpush.msra.mxu0 %v680
        %v682 = vand.u32 %v296, 4294901760
        %683 = vmatpush.msra.mxu0 %v682
        %v684 = vand.u32 %v295, 4294901760
        %685 = vmatpush.msra.mxu0 %v684
        %v686 = vand.u32 %v294, 4294901760
        %687 = vmatpush.msra.mxu0 %v686
        %v688 = vand.u32 %v293, 4294901760
        %689 = vmatpush.msra.mxu0 %v688
        %v690 = vand.u32 %v292, 4294901760
        %691 = vmatpush.msra.mxu0 %v690
        %v692 = vand.u32 %v291, 4294901760
        %693 = vmatpush.msra.mxu0 %v692
        %v694 = vand.u32 %v290, 4294901760
        %695 = vmatpush.msra.mxu0 %v694
        %v696 = vand.u32 %v289, 4294901760
        %697 = vmatpush.msra.mxu0 %v696
        %v698 = vand.u32 %v288, 4294901760
        %699 = vmatpush.msra.mxu0 %v698
        %v700 = vand.u32 %v287, 4294901760
        %701 = vmatpush.msra.mxu0 %v700
        %v702 = vand.u32 %v286, 4294901760
        %703 = vmatpush.msra.mxu0 %v702
        %v704 = vand.u32 %v285, 4294901760
        %705 = vmatpush.msra.mxu0 %v704
        %v706 = vand.u32 %v284, 4294901760
        %707 = vmatpush.msra.mxu0 %v706
        %v708 = vand.u32 %v265, 4294901760
        %v709 = vsub.f32 %v265, %v708
        %v710 = vand.u32 %v709, 4294901760
        %v711 = vsub.f32 %v709, %v710
        %v712 = vand.u32 %v711, 4294901760
        %713 = vmatmul.f32.gmra.mxu0 %v712
        %v714 = vpop.f32.mrf.mxu0
        %v715 = vadd.f32 %v670, %v714
        %v716 = vand.u32 %v267, 4294901760
        %v717 = vsub.f32 %v267, %v716
        %v718 = vand.u32 %v717, 4294901760
        %v719 = vsub.f32 %v717, %v718
        %v720 = vand.u32 %v719, 4294901760
        %721 = vmatmul.f32.gmra.mxu0 %v720
        %v722 = vpop.f32.mrf.mxu0
        %v723 = vadd.f32 %v674, %v722
        %724 = vdwg.mxu0
        %v725 = vand.u32 %v299, 4294901760
        %v726 = vsub.f32 %v299, %v725
        %v727 = vand.u32 %v726, 4294901760
        %v728 = vsub.f32 %v726, %v727
        %v729 = vand.u32 %v728, 4294901760
        %730 = vmatpush.msra.mxu0 %v729
        %v731 = vand.u32 %v298, 4294901760
        %v732 = vsub.f32 %v298, %v731
        %v733 = vand.u32 %v732, 4294901760
        %v734 = vsub.f32 %v732, %v733
        %v735 = vand.u32 %v734, 4294901760
        %736 = vmatpush.msra.mxu0 %v735
        %v737 = vand.u32 %v297, 4294901760
        %v738 = vsub.f32 %v297, %v737
        %v739 = vand.u32 %v738, 4294901760
        %v740 = vsub.f32 %v738, %v739
        %v741 = vand.u32 %v740, 4294901760
        %742 = vmatpush.msra.mxu0 %v741
        %v743 = vand.u32 %v296, 4294901760
        %v744 = vsub.f32 %v296, %v743
        %v745 = vand.u32 %v744, 4294901760
        %v746 = vsub.f32 %v744, %v745
        %v747 = vand.u32 %v746, 4294901760
        %748 = vmatpush.msra.mxu0 %v747
        %v749 = vand.u32 %v295, 4294901760
        %v750 = vsub.f32 %v295, %v749
        %v751 = vand.u32 %v750, 4294901760
        %v752 = vsub.f32 %v750, %v751
        %v753 = vand.u32 %v752, 4294901760
        %754 = vmatpush.msra.mxu0 %v753
        %v755 = vand.u32 %v294, 4294901760
        %v756 = vsub.f32 %v294, %v755
        %v757 = vand.u32 %v756, 4294901760
        %v758 = vsub.f32 %v756, %v757
        %v759 = vand.u32 %v758, 4294901760
        %760 = vmatpush.msra.mxu0 %v759
        %v761 = vand.u32 %v293, 4294901760
        %v762 = vsub.f32 %v293, %v761
        %v763 = vand.u32 %v762, 4294901760
        %v764 = vsub.f32 %v762, %v763
        %v765 = vand.u32 %v764, 4294901760
        %766 = vmatpush.msra.mxu0 %v765
        %v767 = vand.u32 %v292, 4294901760
        %v768 = vsub.f32 %v292, %v767
        %v769 = vand.u32 %v768, 4294901760
        %v770 = vsub.f32 %v768, %v769
        %v771 = vand.u32 %v770, 4294901760
        %772 = vmatpush.msra.mxu0 %v771
        %v773 = vand.u32 %v291, 4294901760
        %v774 = vsub.f32 %v291, %v773
        %v775 = vand.u32 %v774, 4294901760
        %v776 = vsub.f32 %v774, %v775
        %v777 = vand.u32 %v776, 4294901760
        %778 = vmatpush.msra.mxu0 %v777
        %v779 = vand.u32 %v290, 4294901760
        %v780 = vsub.f32 %v290, %v779
        %v781 = vand.u32 %v780, 4294901760
        %v782 = vsub.f32 %v780, %v781
        %v783 = vand.u32 %v782, 4294901760
        %784 = vmatpush.msra.mxu0 %v783
        %v785 = vand.u32 %v289, 4294901760
        %v786 = vsub.f32 %v289, %v785
        %v787 = vand.u32 %v786, 4294901760
        %v788 = vsub.f32 %v786, %v787
        %v789 = vand.u32 %v788, 4294901760
        %790 = vmatpush.msra.mxu0 %v789
        %v791 = vand.u32 %v288, 4294901760
        %v792 = vsub.f32 %v288, %v791
        %v793 = vand.u32 %v792, 4294901760
        %v794 = vsub.f32 %v792, %v793
        %v795 = vand.u32 %v794, 4294901760
        %796 = vmatpush.msra.mxu0 %v795
        %v797 = vand.u32 %v287, 4294901760
        %v798 = vsub.f32 %v287, %v797
        %v799 = vand.u32 %v798, 4294901760
        %v800 = vsub.f32 %v798, %v799
        %v801 = vand.u32 %v800, 4294901760
        %802 = vmatpush.msra.mxu0 %v801
        %v803 = vand.u32 %v286, 4294901760
        %v804 = vsub.f32 %v286, %v803
        %v805 = vand.u32 %v804, 4294901760
        %v806 = vsub.f32 %v804, %v805
        %v807 = vand.u32 %v806, 4294901760
        %808 = vmatpush.msra.mxu0 %v807
        %v809 = vand.u32 %v285, 4294901760
        %v810 = vsub.f32 %v285, %v809
        %v811 = vand.u32 %v810, 4294901760
        %v812 = vsub.f32 %v810, %v811
        %v813 = vand.u32 %v812, 4294901760
        %814 = vmatpush.msra.mxu0 %v813
        %v815 = vand.u32 %v284, 4294901760
        %v816 = vsub.f32 %v284, %v815
        %v817 = vand.u32 %v816, 4294901760
        %v818 = vsub.f32 %v816, %v817
        %v819 = vand.u32 %v818, 4294901760
        %820 = vmatpush.msra.mxu0 %v819
        %v821 = vand.u32 %v265, 4294901760
        %822 = vmatmul.f32.gmra.mxu0 %v821
        %v823 = vpop.f32.mrf.mxu0
        %v824 = vadd.f32 %v715, %v823
        %v825 = vand.u32 %v267, 4294901760
        %826 = vmatmul.f32.gmra.mxu0 %v825
        %v827 = vpop.f32.mrf.mxu0
        %v828 = vadd.f32 %v723, %v827
        %829 = vdwg.mxu0
        %v830 = vand.u32 %v299, 4294901760
        %v831 = vsub.f32 %v299, %v830
        %832 = vmatpush.msra.mxu0 %v831
        %v833 = vand.u32 %v298, 4294901760
        %v834 = vsub.f32 %v298, %v833
        %835 = vmatpush.msra.mxu0 %v834
        %v836 = vand.u32 %v297, 4294901760
        %v837 = vsub.f32 %v297, %v836
        %838 = vmatpush.msra.mxu0 %v837
        %v839 = vand.u32 %v296, 4294901760
        %v840 = vsub.f32 %v296, %v839
        %841 = vmatpush.msra.mxu0 %v840
        %v842 = vand.u32 %v295, 4294901760
        %v843 = vsub.f32 %v295, %v842
        %844 = vmatpush.msra.mxu0 %v843
        %v845 = vand.u32 %v294, 4294901760
        %v846 = vsub.f32 %v294, %v845
        %847 = vmatpush.msra.mxu0 %v846
        %v848 = vand.u32 %v293, 4294901760
        %v849 = vsub.f32 %v293, %v848
        %850 = vmatpush.msra.mxu0 %v849
        %v851 = vand.u32 %v292, 4294901760
        %v852 = vsub.f32 %v292, %v851
        %853 = vmatpush.msra.mxu0 %v852
        %v854 = vand.u32 %v291, 4294901760
        %v855 = vsub.f32 %v291, %v854
        %856 = vmatpush.msra.mxu0 %v855
        %v857 = vand.u32 %v290, 4294901760
        %v858 = vsub.f32 %v290, %v857
        %859 = vmatpush.msra.mxu0 %v858
        %v860 = vand.u32 %v289, 4294901760
        %v861 = vsub.f32 %v289, %v860
        %862 = vmatpush.msra.mxu0 %v861
        %v863 = vand.u32 %v288, 4294901760
        %v864 = vsub.f32 %v288, %v863
        %865 = vmatpush.msra.mxu0 %v864
        %v866 = vand.u32 %v287, 4294901760
        %v867 = vsub.f32 %v287, %v866
        %868 = vmatpush.msra.mxu0 %v867
        %v869 = vand.u32 %v286, 4294901760
        %v870 = vsub.f32 %v286, %v869
        %871 = vmatpush.msra.mxu0 %v870
        %v872 = vand.u32 %v285, 4294901760
        %v873 = vsub.f32 %v285, %v872
        %874 = vmatpush.msra.mxu0 %v873
        %v875 = vand.u32 %v284, 4294901760
        %v876 = vsub.f32 %v284, %v875
        %877 = vmatpush.msra.mxu0 %v876
        %v878 = vand.u32 %v265, 4294901760
        %v879 = vsub.f32 %v265, %v878
        %880 = vmatmul.f32.gmra.mxu0 %v879
        %v881 = vpop.f32.mrf.mxu0
        %v882 = vadd.f32 %v824, %v881
        %v883 = vand.u32 %v267, 4294901760
        %v884 = vsub.f32 %v267, %v883
        %885 = vmatmul.f32.gmra.mxu0 %v884
        %v886 = vpop.f32.mrf.mxu0
        %v887 = vadd.f32 %v828, %v886
        %888 = vdwg.mxu0
        %v889 = vand.u32 %v299, 4294901760
        %890 = vmatpush.msra.mxu0 %v889
        %v891 = vand.u32 %v298, 4294901760
        %892 = vmatpush.msra.mxu0 %v891
        %v893 = vand.u32 %v297, 4294901760
        %894 = vmatpush.msra.mxu0 %v893
        %v895 = vand.u32 %v296, 4294901760
        %896 = vmatpush.msra.mxu0 %v895
        %v897 = vand.u32 %v295, 4294901760
        %898 = vmatpush.msra.mxu0 %v897
        %v899 = vand.u32 %v294, 4294901760
        %900 = vmatpush.msra.mxu0 %v899
        %v901 = vand.u32 %v293, 4294901760
        %902 = vmatpush.msra.mxu0 %v901
        %v903 = vand.u32 %v292, 4294901760
        %904 = vmatpush.msra.mxu0 %v903
        %v905 = vand.u32 %v291, 4294901760
        %906 = vmatpush.msra.mxu0 %v905
        %v907 = vand.u32 %v290, 4294901760
        %908 = vmatpush.msra.mxu0 %v907
        %v909 = vand.u32 %v289, 4294901760
        %910 = vmatpush.msra.mxu0 %v909
        %v911 = vand.u32 %v288, 4294901760
        %912 = vmatpush.msra.mxu0 %v911
        %v913 = vand.u32 %v287, 4294901760
        %914 = vmatpush.msra.mxu0 %v913
        %v915 = vand.u32 %v286, 4294901760
        %916 = vmatpush.msra.mxu0 %v915
        %v917 = vand.u32 %v285, 4294901760
        %918 = vmatpush.msra.mxu0 %v917
        %v919 = vand.u32 %v284, 4294901760
        %920 = vmatpush.msra.mxu0 %v919
        %v921 = vand.u32 %v265, 4294901760
        %v922 = vsub.f32 %v265, %v921
        %v923 = vand.u32 %v922, 4294901760
        %924 = vmatmul.f32.gmra.mxu0 %v923
        %v925 = vpop.f32.mrf.mxu0
        %v926 = vadd.f32 %v882, %v925
        %v927 = vand.u32 %v267, 4294901760
        %v928 = vsub.f32 %v267, %v927
        %v929 = vand.u32 %v928, 4294901760
        %930 = vmatmul.f32.gmra.mxu0 %v929
        %v931 = vpop.f32.mrf.mxu0
        %v932 = vadd.f32 %v887, %v931
        %933 = vdwg.mxu0
        %v934 = vand.u32 %v299, 4294901760
        %v935 = vsub.f32 %v299, %v934
        %v936 = vand.u32 %v935, 4294901760
        %937 = vmatpush.msra.mxu0 %v936
        %v938 = vand.u32 %v298, 4294901760
        %v939 = vsub.f32 %v298, %v938
        %v940 = vand.u32 %v939, 4294901760
        %941 = vmatpush.msra.mxu0 %v940
        %v942 = vand.u32 %v297, 4294901760
        %v943 = vsub.f32 %v297, %v942
        %v944 = vand.u32 %v943, 4294901760
        %945 = vmatpush.msra.mxu0 %v944
        %v946 = vand.u32 %v296, 4294901760
        %v947 = vsub.f32 %v296, %v946
        %v948 = vand.u32 %v947, 4294901760
        %949 = vmatpush.msra.mxu0 %v948
        %v950 = vand.u32 %v295, 4294901760
        %v951 = vsub.f32 %v295, %v950
        %v952 = vand.u32 %v951, 4294901760
        %953 = vmatpush.msra.mxu0 %v952
        %v954 = vand.u32 %v294, 4294901760
        %v955 = vsub.f32 %v294, %v954
        %v956 = vand.u32 %v955, 4294901760
        %957 = vmatpush.msra.mxu0 %v956
        %v958 = vand.u32 %v293, 4294901760
        %v959 = vsub.f32 %v293, %v958
        %v960 = vand.u32 %v959, 4294901760
        %961 = vmatpush.msra.mxu0 %v960
        %v962 = vand.u32 %v292, 4294901760
        %v963 = vsub.f32 %v292, %v962
        %v964 = vand.u32 %v963, 4294901760
        %965 = vmatpush.msra.mxu0 %v964
        %v966 = vand.u32 %v291, 4294901760
        %v967 = vsub.f32 %v291, %v966
        %v968 = vand.u32 %v967, 4294901760
        %969 = vmatpush.msra.mxu0 %v968
        %v970 = vand.u32 %v290, 4294901760
        %v971 = vsub.f32 %v290, %v970
        %v972 = vand.u32 %v971, 4294901760
        %973 = vmatpush.msra.mxu0 %v972
        %v974 = vand.u32 %v289, 4294901760
        %v975 = vsub.f32 %v289, %v974
        %v976 = vand.u32 %v975, 4294901760
        %977 = vmatpush.msra.mxu0 %v976
        %v978 = vand.u32 %v288, 4294901760
        %v979 = vsub.f32 %v288, %v978
        %v980 = vand.u32 %v979, 4294901760
        %981 = vmatpush.msra.mxu0 %v980
        %v982 = vand.u32 %v287, 4294901760
        %v983 = vsub.f32 %v287, %v982
        %v984 = vand.u32 %v983, 4294901760
        %985 = vmatpush.msra.mxu0 %v984
        %v986 = vand.u32 %v286, 4294901760
        %v987 = vsub.f32 %v286, %v986
        %v988 = vand.u32 %v987, 4294901760
        %989 = vmatpush.msra.mxu0 %v988
        %v990 = vand.u32 %v285, 4294901760
        %v991 = vsub.f32 %v285, %v990
        %v992 = vand.u32 %v991, 4294901760
        %993 = vmatpush.msra.mxu0 %v992
        %v994 = vand.u32 %v284, 4294901760
        %v995 = vsub.f32 %v284, %v994
        %v996 = vand.u32 %v995, 4294901760
        %997 = vmatpush.msra.mxu0 %v996
        %v998 = vand.u32 %v265, 4294901760
        %999 = vmatmul.f32.gmra.mxu0 %v998
        %v1000 = vpop.f32.mrf.mxu0
        %v1001 = vadd.f32 %v926, %v1000
        %v1002 = vand.u32 %v267, 4294901760
        %1003 = vmatmul.f32.gmra.mxu0 %v1002
        %v1004 = vpop.f32.mrf.mxu0
        %v1005 = vadd.f32 %v932, %v1004
        %1006 = vdwg.mxu0
        %v1007 = vand.u32 %v299, 4294901760
        %1008 = vmatpush.msra.mxu0 %v1007
        %v1009 = vand.u32 %v298, 4294901760
        %1010 = vmatpush.msra.mxu0 %v1009
        %v1011 = vand.u32 %v297, 4294901760
        %1012 = vmatpush.msra.mxu0 %v1011
        %v1013 = vand.u32 %v296, 4294901760
        %1014 = vmatpush.msra.mxu0 %v1013
        %v1015 = vand.u32 %v295, 4294901760
        %1016 = vmatpush.msra.mxu0 %v1015
        %v1017 = vand.u32 %v294, 4294901760
        %1018 = vmatpush.msra.mxu0 %v1017
        %v1019 = vand.u32 %v293, 4294901760
        %1020 = vmatpush.msra.mxu0 %v1019
        %v1021 = vand.u32 %v292, 4294901760
        %1022 = vmatpush.msra.mxu0 %v1021
        %v1023 = vand.u32 %v291, 4294901760
        %1024 = vmatpush.msra.mxu0 %v1023
        %v1025 = vand.u32 %v290, 4294901760
        %1026 = vmatpush.msra.mxu0 %v1025
        %v1027 = vand.u32 %v289, 4294901760
        %1028 = vmatpush.msra.mxu0 %v1027
        %v1029 = vand.u32 %v288, 4294901760
        %1030 = vmatpush.msra.mxu0 %v1029
        %v1031 = vand.u32 %v287, 4294901760
        %1032 = vmatpush.msra.mxu0 %v1031
        %v1033 = vand.u32 %v286, 4294901760
        %1034 = vmatpush.msra.mxu0 %v1033
        %v1035 = vand.u32 %v285, 4294901760
        %1036 = vmatpush.msra.mxu0 %v1035
        %v1037 = vand.u32 %v284, 4294901760
        %1038 = vmatpush.msra.mxu0 %v1037
        %v1039 = vand.u32 %v265, 4294901760
        %1040 = vmatmul.f32.gmra.mxu0 %v1039
        %v1041 = vpop.f32.mrf.mxu0
        %v1042 = vadd.f32 %v1001, %v1041
        %v1043 = vand.u32 %v267, 4294901760
        %1044 = vmatmul.f32.gmra.mxu0 %v1043
        %v1045 = vpop.f32.mrf.mxu0
        %v1046 = vadd.f32 %v1005, %v1045
        %1047 = vdwg.mxu0
        %1048 = vst [vmem:[%s261] sm:$0xff] %v1042
        %1049 = vst [vmem:[%s261 + $0x8] sm:$0xff] %v1046
        %s1050 = sand.u32 %s121, 1
        %s1051 = scalar_lea.sflag [#allocation4], %s1050
        %s1052 = sand.u32 %s121, 1
        %s1053 = smul.addr %s1052, 16
        %s1054 = scalar_lea.vmem [#allocation8], %s1053
        // Predicated region
        $region45: #{tpu_custom_call.1} parent=31 // pred_check
          %p1055 = pneg %p131
        $region46: #{tpu_custom_call.1} parent=31 // pred_check_branch
          %1057 = sbr.rel (%p1055) target = $region48
        $region47: #{tpu_custom_call.1} parent=31 // pred_region
          %s1058 = smul.u32 2, %s25
          %1060 = vsyncadd %s1051, 0
          %s1061 = smul.addr %s1058, 2
          %s1062 = sadd.s32 %s26, %s1061
          %s1063 = smul.addr %s1062, 8
          %s1064 = scalar_lea.hbm %s3, %s1063
          %s1065 = sshll.u32 %s1054, 4
          %s1066 = int_to_ptr.vmem [resolvable:$true] %s1065
          %s1067 = sshll.u32 %s1064, 4
          %s1068 = int_to_ptr.hbm [resolvable:$true] %s1067
          %1073 = dma.vmem_to_hbm [thread:$0]  %s1066, 256, %s1068, %s1051, 128, 256, 8
        $region48: #{tpu_custom_call.1} parent=31 // pred_fallthru
          _
      $region32: #{tpu_custom_call.1} parent=5 // pred_fallthru
        _
      %p1074 = scmp.le.s32.totalorder 2, %s16
      // Predicated region
      $region49: #{tpu_custom_call.1} parent=5 // pred_check
        %p1075 = pneg %p1074
      $region50: #{tpu_custom_call.1} parent=5 // pred_check_branch
        %1077 = sbr.rel (%p1075) target = $region52
      $region51: #{tpu_custom_call.1} parent=5 // pred_region
        %s1078 = ssub.s32 %s16, 2
        // Predicated region
        $region53: #{tpu_custom_call.1} parent=51 // pred_check
          %p1079 = pneg %p137
        $region54: #{tpu_custom_call.1} parent=51 // pred_check_branch
          %1081 = sbr.rel (%p1079) target = $region56
        $region55: #{tpu_custom_call.1} parent=51 // pred_region
          %s1082 = sand.u32 %s122, 1
          %s1083 = scalar_lea.sflag [#allocation4], %s1082
          %s1084 = sand.u32 %s122, 1
          %s1085 = smul.addr %s1084, 16
          %s1086 = scalar_lea.vmem [#allocation8], %s1085
          %1088 = dma.done %s1083, 256
        $region56: #{tpu_custom_call.1} parent=51 // pred_fallthru
          _
      $region52: #{tpu_custom_call.1} parent=5 // pred_fallthru
        _
    $region6: #{tpu_custom_call.1} parent=1 // loop_footer
      %s20 = sadd.s32 1, %s16
    $region7: #{tpu_custom_call.1} parent=1 // loop_footer_branch
      %15 = sbr.rel target = $region3
    $region8: #{tpu_custom_call.1} parent=1 // loop_exit
      _
    %1089 = vsyncpa [#allocation3], 1
    %s1090 = scalar_lea.sflag [#allocation3], 1
    %1091 = vsyncpa %s1090, 1
    %1092 = vsyncpa [#allocation6], 1
    %s1093 = scalar_lea.sflag [#allocation6], 1
    %1094 = vsyncpa %s1093, 1
    %1095 = vsyncpa [#allocation4], 1
    %s1096 = scalar_lea.sflag [#allocation4], 1
    %1097 = vsyncpa %s1096, 1

</llo_original>
